<compile_context>
chip_gen: v5e
topology: v5e:2x2
jax: 0.10.0
libtpu: 0.0.40
codegen_flags: <defaults>
</compile_context>

<pallas_src>
import jax
import jax.numpy as jnp
from jax.experimental import pallas as pl
from jax.experimental.pallas import tpu as pltpu

_ALIGN = 16  # sublane alignment that is safe for bf16 (16, 128) tiling


def _round_up(x, m):
    return ((x + m - 1) // m) * m


def _cdiv(a, b):
    return (a + b - 1) // b


def graphsage_kernel(movie_ref, user_ref, w_enc_ref, w_cls_ref,
                     movie_emb_ref, user_emb_ref, scores_ref):
    """One grid step: a tile of `tile` (movie, user) pairs.

    movie_ref/user_ref : (tile, F)    bf16 node features
    w_enc_ref          : (F, Dp)      bf16 enc weight, pre-transposed + D-padded
    w_cls_ref          : (2, Dp, Cp)  bf16 classifier halves (movie, user)
    outputs            : (tile, Dp) bf16 x2 embeddings, (tile, Cp) f32 scores
    """
    w_enc = w_enc_ref[...]

    # Encoder: relu((T,F)@(F,Dp)) with f32 accumulation, bf16 MXU inputs.
    movie_emb = jnp.maximum(
        jnp.dot(movie_ref[...], w_enc, preferred_element_type=jnp.float32), 0.0)
    user_emb = jnp.maximum(
        jnp.dot(user_ref[...], w_enc, preferred_element_type=jnp.float32), 0.0)

    # bf16 embeddings: halves the dominant output writeback bytes, and feeds
    # the classifier MXU passes at full bf16 rate.
    movie_emb_bf = movie_emb.astype(movie_emb_ref.dtype)
    user_emb_bf = user_emb.astype(user_emb_ref.dtype)
    movie_emb_ref[...] = movie_emb_bf
    user_emb_ref[...] = user_emb_bf

    # Classifier: W_cls @ cat([movie, user], 0) decomposed over the concat:
    #   scores = movie_emb @ W_m^T + user_emb @ W_u^T   (tile, Cp), f32 accum.
    scores_ref[...] = (
        jnp.dot(movie_emb_bf, w_cls_ref[0], preferred_element_type=jnp.float32)
        + jnp.dot(user_emb_bf, w_cls_ref[1], preferred_element_type=jnp.float32))


def supervised_graphsage_forward(movie_feats, user_feats, w_enc, w_cls,
                                 *, tile_n=2048, compute_dtype=jnp.bfloat16):
    """movie_feats/user_feats: (N, F); w_enc: (D, F); w_cls: (C, 2D).

    Returns (movie_embeds (D, N), user_embeds (D, N), scores (N, C)) — same
    conventions as the torch module's forward().
    """
    N, F = movie_feats.shape
    D, F2 = w_enc.shape
    C = w_cls.shape[0]
    assert F2 == F and w_cls.shape[1] == 2 * D

    f32 = jnp.float32
    # Lane-dense output widths.
    Dp = _round_up(D, 128)
    Cp = _round_up(C, 128)

    # ---- Pair-axis tiling ----
    # Small N: one grid step (per-step pipeline overhead would dominate).
    # Large N: big tiles (fewer steps amortize ~0.35us/step), but keep the tile
    # count >= 2 and even so both v7x TensorCores get work on the parallel axis.
    Np0 = _round_up(N, _ALIGN)
    if Np0 <= tile_n:
        tile = Np0
        nt = 1
    else:
        nt = _cdiv(Np0, tile_n)
        if nt % 2 == 1:
            nt += 1
        tile = _round_up(_cdiv(Np0, nt), _ALIGN)
        nt = _cdiv(Np0, tile)
    Np = nt * tile

    # ---- Wrapper-side layout plumbing (keeps the kernel dots plain MXU) ----
    # Encoder weight: transpose + pad output dim, bf16.
    w_enc_t = jnp.zeros((F, Dp), compute_dtype).at[:, :D].set(
        w_enc.T.astype(compute_dtype))
    # Classifier weight: pre-split concat halves, transpose, pad, bf16.
    w_cls_m = jnp.zeros((Dp, Cp), compute_dtype).at[:D, :C].set(
        w_cls[:, :D].T.astype(compute_dtype))
    w_cls_u = jnp.zeros((Dp, Cp), compute_dtype).at[:D, :C].set(
        w_cls[:, D:].T.astype(compute_dtype))
    w_cls_t = jnp.stack([w_cls_m, w_cls_u], axis=0)            # (2, Dp, Cp)

    # Pad pair axis only (cast to bf16 halves feature DMA bytes). No interleave
    # copy: movie/user go in as two separate tiled inputs.
    def pad_feats(x):
        return jnp.zeros((Np, F), compute_dtype).at[:N].set(
            x.astype(compute_dtype))

    movie_p = pad_feats(movie_feats)
    user_p = pad_feats(user_feats)

    movie_emb_p, user_emb_p, scores_p = pl.pallas_call(
        graphsage_kernel,
        out_shape=(jax.ShapeDtypeStruct((Np, Dp), compute_dtype),
                   jax.ShapeDtypeStruct((Np, Dp), compute_dtype),
                   jax.ShapeDtypeStruct((Np, Cp), f32)),
        grid_spec=pltpu.PrefetchScalarGridSpec(
            num_scalar_prefetch=0,
            grid=(nt,),
            in_specs=[
                pl.BlockSpec((tile, F), lambda i: (i, 0)),
                pl.BlockSpec((tile, F), lambda i: (i, 0)),
                pl.BlockSpec((F, Dp), lambda i: (0, 0)),
                pl.BlockSpec((2, Dp, Cp), lambda i: (0, 0, 0)),
            ],
            out_specs=(
                pl.BlockSpec((tile, Dp), lambda i: (i, 0)),
                pl.BlockSpec((tile, Dp), lambda i: (i, 0)),
                pl.BlockSpec((tile, Cp), lambda i: (i, 0)),
            )),
        compiler_params=pltpu.CompilerParams(
            dimension_semantics=("parallel",),
            vmem_limit_bytes=48 * 1024 * 1024),
    )(movie_p, user_p, w_enc_t, w_cls_t)

    # Unpad / transpose back to the torch module's conventions.
    movie_embeds = movie_emb_p[:N, :D].astype(f32).T       # (D, N)
    user_embeds = user_emb_p[:N, :D].astype(f32).T         # (D, N)
    scores = scores_p[:N, :C]                               # (N, C)
    return movie_embeds, user_embeds, scores


def reference_forward(movie_feats, user_feats, w_enc, w_cls,
                      compute_dtype=jnp.bfloat16):
    """Pure-JAX mirror of the torch forward, applying the same bf16 rounding
    the kernel applies (inputs, encoder weight, embeddings, classifier weight)
    with f32 accumulation."""
    f32 = jnp.float32
    mf = movie_feats.astype(compute_dtype).astype(f32)
    uf = user_feats.astype(compute_dtype).astype(f32)
    we = w_enc.astype(compute_dtype).astype(f32)
    movie_emb = jnp.maximum(we @ mf.T, 0.0)                  # (D, N)
    user_emb = jnp.maximum(we @ uf.T, 0.0)                   # (D, N)
    movie_emb_b = movie_emb.astype(compute_dtype).astype(f32)
    user_emb_b = user_emb.astype(compute_dtype).astype(f32)
    wc = w_cls.astype(compute_dtype).astype(f32)
    merge = jnp.concatenate([movie_emb_b, user_emb_b], axis=0)
    scores = (wc @ merge).T
    return movie_emb_b, user_emb_b, scores


if __name__ == "__main__":
    key = jax.random.PRNGKey(0)
    k_feat, k_enc, k_cls, k_movie, k_user = jax.random.split(key, 5)

    num_nodes_total = 64   # node feature table
    feat_dim = 32          # raw node feature dim
    embed_dim = 32         # enc.embed_dim
    num_classes = 5        # ratings 1..5
    num_pairs = 8          # len(movie_nodes) == len(user_nodes)

    # Node feature table + node index selection (glue, plain JAX).
    features = jax.random.normal(k_feat, (num_nodes_total, feat_dim), jnp.float32)
    movie_nodes = jax.random.randint(k_movie, (num_pairs,), 0, num_nodes_total)
    user_nodes = jax.random.randint(k_user, (num_pairs,), 0, num_nodes_total)
    movie_feats = features[movie_nodes]          # (N, F)
    user_feats = features[user_nodes]            # (N, F)

    # Encoder weight (GraphSAGE enc.weight): (embed_dim, feat_dim).
    w_enc = jax.random.normal(k_enc, (embed_dim, feat_dim), jnp.float32) * 0.1

    # Classifier weight: (num_classes, 2*embed_dim), xavier_uniform_ init.
    fan_in, fan_out = 2 * embed_dim, num_classes
    bound = (6.0 / (fan_in + fan_out)) ** 0.5
    w_cls = jax.random.uniform(k_cls, (num_classes, 2 * embed_dim),
                               jnp.float32, minval=-bound, maxval=bound)

    ATOL, RTOL = 2e-2, 2e-2   # loosened: classifier + embeddings are bf16 now

    # --- Small case (matches the module's toy usage; single grid step) ---
    movie_emb, user_emb, scores = supervised_graphsage_forward(
        movie_feats, user_feats, w_enc, w_cls)
    jax.block_until_ready((movie_emb, user_emb, scores))

    ref_m, ref_u, ref_s = reference_forward(movie_feats, user_feats, w_enc, w_cls)
    assert movie_emb.shape == (embed_dim, num_pairs)
    assert user_emb.shape == (embed_dim, num_pairs)
    assert scores.shape == (num_pairs, num_classes)
    assert jnp.allclose(movie_emb, ref_m, atol=ATOL, rtol=RTOL)
    assert jnp.allclose(user_emb, ref_u, atol=ATOL, rtol=RTOL)
    assert jnp.allclose(scores, ref_s, atol=ATOL, rtol=RTOL)

    # --- Larger batched case (still a single big tile by default) ---
    big_pairs = 300
    bm = jax.random.randint(jax.random.PRNGKey(1), (big_pairs,), 0, num_nodes_total)
    bu = jax.random.randint(jax.random.PRNGKey(2), (big_pairs,), 0, num_nodes_total)
    big_movie_feats, big_user_feats = features[bm], features[bu]
    m2, u2, s2 = supervised_graphsage_forward(
        big_movie_feats, big_user_feats, w_enc, w_cls)
    jax.block_until_ready((m2, u2, s2))
    r2m, r2u, r2s = reference_forward(big_movie_feats, big_user_feats, w_enc, w_cls)
    assert m2.shape == (embed_dim, big_pairs)
    assert u2.shape == (embed_dim, big_pairs)
    assert s2.shape == (big_pairs, num_classes)
    assert jnp.allclose(m2, r2m, atol=ATOL, rtol=RTOL)
    assert jnp.allclose(u2, r2u, atol=ATOL, rtol=RTOL)
    assert jnp.allclose(s2, r2s, atol=ATOL, rtol=RTOL)

    # --- Force a multi-tile grid (exercises tiling, padding, even tile count) ---
    m3, u3, s3 = supervised_graphsage_forward(
        big_movie_feats, big_user_feats, w_enc, w_cls, tile_n=128)
    jax.block_until_ready((m3, u3, s3))
    assert jnp.allclose(m3, r2m, atol=ATOL, rtol=RTOL)
    assert jnp.allclose(u3, r2u, atol=ATOL, rtol=RTOL)
    assert jnp.allclose(s3, r2s, atol=ATOL, rtol=RTOL)

    print("KERNEL_OK")
</pallas_src>

<mosaic_0001>
module attributes {stable_mosaic.version = 11 : i64} {
  func.func @graphsage_kernel(%arg0: i32, %arg1: memref<16x32xbf16, #tpu.memory_space<vmem>>, %arg2: memref<16x32xbf16, #tpu.memory_space<vmem>>, %arg3: memref<32x128xbf16, #tpu.memory_space<vmem>>, %arg4: memref<2x128x128xbf16, #tpu.memory_space<vmem>>, %arg5: memref<16x128xbf16, #tpu.memory_space<vmem>>, %arg6: memref<16x128xbf16, #tpu.memory_space<vmem>>, %arg7: memref<16x128xf32, #tpu.memory_space<vmem>>) attributes {dimension_semantics = [#tpu.dimension_semantics<parallel>], iteration_bounds = array<i64: 1>, scalar_prefetch = 0 : i64, scratch_operands = 0 : i64, tpu.core_type = #tpu.core_type<tc>, window_params = [{transform_indices = @transform_0, window_bounds = array<i64: 16, 32>}, {transform_indices = @transform_1, window_bounds = array<i64: 16, 32>}, {pipeline_mode = #tpu.pipeline_mode<synchronous>, transform_indices = @transform_2, window_bounds = array<i64: 32, 128>}, {pipeline_mode = #tpu.pipeline_mode<synchronous>, transform_indices = @transform_3, window_bounds = array<i64: 2, 128, 128>}, {transform_indices = @transform_4, window_bounds = array<i64: 16, 128>}, {transform_indices = @transform_5, window_bounds = array<i64: 16, 128>}, {transform_indices = @transform_6, window_bounds = array<i64: 16, 128>}]} {
    %c0 = arith.constant 0 : index
    %c0_0 = arith.constant 0 : index
    %0 = vector.load %arg3[%c0, %c0_0] : memref<32x128xbf16, #tpu.memory_space<vmem>>, vector<32x128xbf16>
    %c0_1 = arith.constant 0 : index
    %c0_2 = arith.constant 0 : index
    %1 = vector.load %arg1[%c0_1, %c0_2] : memref<16x32xbf16, #tpu.memory_space<vmem>>, vector<16x32xbf16>
    %cst = arith.constant dense<0.000000e+00> : vector<16x128xf32>
    %2 = tpu.matmul %1, %0, %cst {dimension_numbers = #tpu.dot_dimension_numbers<[1], [0], [0], [1], [0, 0, 1, 1], [], []>} : vector<16x32xbf16>, vector<32x128xbf16>, vector<16x128xf32> -> vector<16x128xf32>
    %cst_3 = arith.constant 0.000000e+00 : f32
    %3 = vector.broadcast %cst_3 : f32 to vector<16x128xf32>
    %4 = arith.maximumf %2, %3 : vector<16x128xf32>
    %c0_4 = arith.constant 0 : index
    %c0_5 = arith.constant 0 : index
    %5 = vector.load %arg2[%c0_4, %c0_5] : memref<16x32xbf16, #tpu.memory_space<vmem>>, vector<16x32xbf16>
    %cst_6 = arith.constant dense<0.000000e+00> : vector<16x128xf32>
    %6 = tpu.matmul %5, %0, %cst_6 {dimension_numbers = #tpu.dot_dimension_numbers<[1], [0], [0], [1], [0, 0, 1, 1], [], []>} : vector<16x32xbf16>, vector<32x128xbf16>, vector<16x128xf32> -> vector<16x128xf32>
    %cst_7 = arith.constant 0.000000e+00 : f32
    %7 = vector.broadcast %cst_7 : f32 to vector<16x128xf32>
    %8 = arith.maximumf %6, %7 : vector<16x128xf32>
    %9 = arith.truncf %4 : vector<16x128xf32> to vector<16x128xbf16>
    %10 = arith.truncf %8 : vector<16x128xf32> to vector<16x128xbf16>
    %c0_8 = arith.constant 0 : index
    %c0_9 = arith.constant 0 : index
    %11 = vector.load %arg5[%c0_8, %c0_9] : memref<16x128xbf16, #tpu.memory_space<vmem>>, vector<16x128xbf16>
    tpu.vector_store %arg5[%c0_8, %c0_9], %9 {strides = array<i32>} : memref<16x128xbf16, #tpu.memory_space<vmem>>, vector<16x128xbf16>,
    %c0_10 = arith.constant 0 : index
    %c0_11 = arith.constant 0 : index
    %12 = vector.load %arg6[%c0_10, %c0_11] : memref<16x128xbf16, #tpu.memory_space<vmem>>, vector<16x128xbf16>
    tpu.vector_store %arg6[%c0_10, %c0_11], %10 {strides = array<i32>} : memref<16x128xbf16, #tpu.memory_space<vmem>>, vector<16x128xbf16>,
    %c0_12 = arith.constant 0 : index
    %c0_13 = arith.constant 0 : index
    %c0_14 = arith.constant 0 : index
    %13 = vector.load %arg4[%c0_12, %c0_13, %c0_14] : memref<2x128x128xbf16, #tpu.memory_space<vmem>>, vector<1x128x128xbf16>
    %14 = vector.shape_cast %13 : vector<1x128x128xbf16> to vector<128x128xbf16>
    %cst_15 = arith.constant dense<0.000000e+00> : vector<16x128xf32>
    %15 = tpu.matmul %9, %14, %cst_15 {dimension_numbers = #tpu.dot_dimension_numbers<[1], [0], [0], [1], [0, 0, 1, 1], [], []>} : vector<16x128xbf16>, vector<128x128xbf16>, vector<16x128xf32> -> vector<16x128xf32>
    %c1 = arith.constant 1 : index
    %c0_16 = arith.constant 0 : index
    %c0_17 = arith.constant 0 : index
    %16 = vector.load %arg4[%c1, %c0_16, %c0_17] : memref<2x128x128xbf16, #tpu.memory_space<vmem>>, vector<1x128x128xbf16>
    %17 = vector.shape_cast %16 : vector<1x128x128xbf16> to vector<128x128xbf16>
    %cst_18 = arith.constant dense<0.000000e+00> : vector<16x128xf32>
    %18 = tpu.matmul %10, %17, %cst_18 {dimension_numbers = #tpu.dot_dimension_numbers<[1], [0], [0], [1], [0, 0, 1, 1], [], []>} : vector<16x128xbf16>, vector<128x128xbf16>, vector<16x128xf32> -> vector<16x128xf32>
    %19 = arith.addf %15, %18 : vector<16x128xf32>
    %c0_19 = arith.constant 0 : index
    %c0_20 = arith.constant 0 : index
    %20 = vector.load %arg7[%c0_19, %c0_20] : memref<16x128xf32, #tpu.memory_space<vmem>>, vector<16x128xf32>
    tpu.vector_store %arg7[%c0_19, %c0_20], %19 {strides = array<i32>} : memref<16x128xf32, #tpu.memory_space<vmem>>, vector<16x128xf32>,
    return
  }
  func.func @transform_0(%arg0: i32) -> (i32, i32) {
    %c0_i32 = arith.constant 0 : i32
    %c0_i32_0 = arith.constant 0 : i32
    return %arg0, %c0_i32 : i32, i32
  }
  func.func @transform_1(%arg0: i32) -> (i32, i32) {
    %c0_i32 = arith.constant 0 : i32
    %c0_i32_0 = arith.constant 0 : i32
    return %arg0, %c0_i32 : i32, i32
  }
  func.func @transform_2(%arg0: i32) -> (i32, i32) {
    %c0_i32 = arith.constant 0 : i32
    %c0_i32_0 = arith.constant 0 : i32
    %c0_i32_1 = arith.constant 0 : i32
    return %c0_i32, %c0_i32_0 : i32, i32
  }
  func.func @transform_3(%arg0: i32) -> (i32, i32, i32) {
    %c0_i32 = arith.constant 0 : i32
    %c0_i32_0 = arith.constant 0 : i32
    %c0_i32_1 = arith.constant 0 : i32
    %c0_i32_2 = arith.constant 0 : i32
    return %c0_i32, %c0_i32_0, %c0_i32_1 : i32, i32, i32
  }
  func.func @transform_4(%arg0: i32) -> (i32, i32) {
    %c0_i32 = arith.constant 0 : i32
    %c0_i32_0 = arith.constant 0 : i32
    return %arg0, %c0_i32 : i32, i32
  }
  func.func @transform_5(%arg0: i32) -> (i32, i32) {
    %c0_i32 = arith.constant 0 : i32
    %c0_i32_0 = arith.constant 0 : i32
    return %arg0, %c0_i32 : i32, i32
  }
  func.func @transform_6(%arg0: i32) -> (i32, i32) {
    %c0_i32 = arith.constant 0 : i32
    %c0_i32_0 = arith.constant 0 : i32
    return %arg0, %c0_i32 : i32, i32
  }
}

</mosaic_0001>

<llo_original>
// kernel: tpu_custom_call.1
$region0: #{tpu_custom_call.1}
  #allocation0 [shape = 'u32[]', space=smem, size = 0x4, offset = 0x4, fixed_abs, tag = 'smem constant byte address 0x4 - core index']
  #allocation1 [shape = 'u32[72,128]{1,0:T(1,128)}', space=vmem, size = 0x9000, scoped, tag = 'internal scratch']
  %s0 = inlined_call_operand.hbm [shape: bf16[16,32], index: 0, kind: input, shape index: {}]
  %s1 = inlined_call_operand.hbm [shape: bf16[16,32], index: 1, kind: input, shape index: {}]
  %s2 = inlined_call_operand.hbm [shape: bf16[32,128], index: 2, kind: input, shape index: {}]
  %s3 = inlined_call_operand.hbm [shape: bf16[2,128,128], index: 3, kind: input, shape index: {}]
  %s4 = inlined_call_operand.hbm [shape: bf16[16,128], index: 4, kind: output, shape index: {0}]
  %s5 = inlined_call_operand.hbm [shape: bf16[16,128], index: 5, kind: output, shape index: {1}]
  %s6 = inlined_call_operand.hbm [shape: f32[16,128], index: 6, kind: output, shape index: {2}]
  %7 = xla_tuple %s4, %s5, %s6
  %s8 = sld [smem:[#allocation0]]
  $region58: #{tpu_custom_call.1} parent=0
    _
  %s10 = ssub.s32 1, %s8
  %s11 = scalar_select 0, %s10, %s8
  $region1: #{tpu_custom_call.1} parent=0
    #allocation2 [shape = 'u8[4096]{0}', space=vmem, size = 0x1000, scoped, tag = 'input window, operand 0, single buffered']
    #allocation3 [shape = 's32[1]{0}', space=sflag, size = 0x4, scoped, tag = 'scoped memory for tpu_custom_call.1']
    #allocation4 [shape = 's32[1]{0}', space=sflag, size = 0x4, scoped, tag = 'scoped memory for tpu_custom_call.1']
    #allocation5 [shape = 'u8[4096]{0}', space=vmem, size = 0x1000, scoped, tag = 'input window, operand 1, single buffered']
    #allocation6 [shape = 's32[1]{0}', space=sflag, size = 0x4, scoped, tag = 'scoped memory for tpu_custom_call.1']
    #allocation7 [shape = 'u8[8192]{0}', space=vmem, size = 0x2000, scoped, tag = 'input window, operand 2, single buffered']
    #allocation8 [shape = 'u8[65536]{0}', space=vmem, size = 0x10000, scoped, tag = 'input window, operand 3, single buffered']
    #allocation9 [shape = 's32[1]{0}', space=sflag, size = 0x4, scoped, tag = 'scoped memory for tpu_custom_call.1']
    #allocation10 [shape = 'u8[4096]{0}', space=vmem, size = 0x1000, scoped, tag = 'output window, operand 0, single buffered']
    #allocation11 [shape = 'u8[4096]{0}', space=vmem, size = 0x1000, scoped, tag = 'output window, operand 1, single buffered']
    #allocation12 [shape = 's32[1]{0}', space=sflag, size = 0x4, scoped, tag = 'scoped memory for tpu_custom_call.1']
    #allocation13 [shape = 'u8[8192]{0}', space=vmem, size = 0x2000, scoped, tag = 'output window, operand 2, single buffered']
    %12 = vsyncpa [#allocation3], 0
    %13 = vsyncpa [#allocation6], 0
    %14 = vsyncpa [#allocation9], 0
    %15 = vsyncpa [#allocation4], 0
    %16 = vsyncpa [#allocation12], 0
    // Predicated region
    $region2: #{tpu_custom_call.1} parent=1 // pred_check
      _
    $region3: #{tpu_custom_call.1} parent=1 // pred_check_branch
      %18 = sbr.rel (0) target = $region5
    $region4: #{tpu_custom_call.1} parent=1 // pred_region
      %20 = vsyncadd [#allocation3], 0
      %s21 = sshll.u32 %s0, 4
      %s22 = int_to_ptr.hbm [resolvable:$true] %s21
      %s23 = sshll.u32 [#allocation2], 4
      %s24 = int_to_ptr.vmem [resolvable:$true] %s23
      %29 = dma.hbm_to_vmem [thread:$0]  %s22, 128, %s24, [#allocation3], 64, 64, 4
    $region5: #{tpu_custom_call.1} parent=1 // pred_fallthru
      _
    // Predicated region
    $region6: #{tpu_custom_call.1} parent=1 // pred_check
      _
    $region7: #{tpu_custom_call.1} parent=1 // pred_check_branch
      %31 = sbr.rel (0) target = $region9
    $region8: #{tpu_custom_call.1} parent=1 // pred_region
      %33 = vsyncadd [#allocation6], 0
      %s34 = sshll.u32 %s1, 4
      %s35 = int_to_ptr.hbm [resolvable:$true] %s34
      %s36 = sshll.u32 [#allocation5], 4
      %s37 = int_to_ptr.vmem [resolvable:$true] %s36
      %42 = dma.hbm_to_vmem [thread:$0]  %s35, 128, %s37, [#allocation6], 64, 64, 4
    $region9: #{tpu_custom_call.1} parent=1 // pred_fallthru
      _
    // Predicated region
    $region10: #{tpu_custom_call.1} parent=1 // pred_check
      _
    $region11: #{tpu_custom_call.1} parent=1 // pred_check_branch
      %44 = sbr.rel (0) target = $region13
    $region12: #{tpu_custom_call.1} parent=1 // pred_region
      %46 = vsyncadd [#allocation6], 0
      %s47 = sshll.u32 %s2, 4
      %s48 = int_to_ptr.hbm [resolvable:$true] %s47
      %s49 = sshll.u32 [#allocation7], 4
      %s50 = int_to_ptr.vmem [resolvable:$true] %s49
      %55 = dma.hbm_to_vmem [thread:$0]  %s48, 256, %s50, [#allocation6], 64, 64, 4
    $region13: #{tpu_custom_call.1} parent=1 // pred_fallthru
      _
    // Predicated region
    $region14: #{tpu_custom_call.1} parent=1 // pred_check
      _
    $region15: #{tpu_custom_call.1} parent=1 // pred_check_branch
      %57 = sbr.rel (0) target = $region17
    $region16: #{tpu_custom_call.1} parent=1 // pred_region
      %59 = vsyncadd [#allocation9], 0
      %s60 = sshll.u32 %s3, 4
      %s61 = int_to_ptr.hbm [resolvable:$true] %s60
      %s62 = sshll.u32 [#allocation8], 4
      %s63 = int_to_ptr.vmem [resolvable:$true] %s62
      %68 = dma.hbm_to_vmem [thread:$0]  %s61, 2048, %s63, [#allocation9], 64, 64, 4
    $region17: #{tpu_custom_call.1} parent=1 // pred_fallthru
      _
    // Predicated region
    $region18: #{tpu_custom_call.1} parent=1 // pred_check
      _
    $region19: #{tpu_custom_call.1} parent=1 // pred_check_branch
      %70 = sbr.rel (0) target = $region21
    $region20: #{tpu_custom_call.1} parent=1 // pred_region
      %72 = dma.done [#allocation3], 128
    $region21: #{tpu_custom_call.1} parent=1 // pred_fallthru
      _
    // Predicated region
    $region22: #{tpu_custom_call.1} parent=1 // pred_check
      _
    $region23: #{tpu_custom_call.1} parent=1 // pred_check_branch
      %74 = sbr.rel (0) target = $region25
    $region24: #{tpu_custom_call.1} parent=1 // pred_region
      %76 = dma.done [#allocation6], 128
    $region25: #{tpu_custom_call.1} parent=1 // pred_fallthru
      _
    // Predicated region
    $region26: #{tpu_custom_call.1} parent=1 // pred_check
      _
    $region27: #{tpu_custom_call.1} parent=1 // pred_check_branch
      %78 = sbr.rel (0) target = $region29
    $region28: #{tpu_custom_call.1} parent=1 // pred_region
      %80 = dma.done [#allocation6], 256
    $region29: #{tpu_custom_call.1} parent=1 // pred_fallthru
      _
    // Predicated region
    $region30: #{tpu_custom_call.1} parent=1 // pred_check
      _
    $region31: #{tpu_custom_call.1} parent=1 // pred_check_branch
      %82 = sbr.rel (0) target = $region33
    $region32: #{tpu_custom_call.1} parent=1 // pred_region
      %84 = dma.done [#allocation9], 2048
    $region33: #{tpu_custom_call.1} parent=1 // pred_fallthru
      _
    %v86 = vld [vmem:[#allocation7] sm:$0xf]
    %v87 = vld [vmem:[#allocation7 + $0x4] sm:$0xf]
    %v88 = vld [vmem:[#allocation7 + $0x8] sm:$0xf]
    %v89 = vld [vmem:[#allocation7 + $0xc] sm:$0xf]
    %v90 = vld [vmem:[#allocation2] sm:$0xf]
    %v91 = vld [vmem:[#allocation2 + $0x4] sm:$0xf]
    %v94 = vunpack.c.l.b16 %v90
    %v95 = vunpack.c.l.b16 %v91
    %v96 = vpack.c.b16 %v95, %v94
    %v101 = vunpack.c.l.b16 %v86
    %v102 = vunpack.c.l.b16 %v87
    %v103 = vunpack.c.l.b16 %v88
    %v104 = vunpack.c.l.b16 %v89
    %v105 = vpack.c.b16 %v102, %v101
    %v106 = vpack.c.b16 %v104, %v103
    %vm109 = vcmask 261120
    %v111 = vsel %vm109, %v96, 0
    %113 = vmatpush.bf16.msra.mxu0 0
    %114 = vmatpush.bf16.msra.mxu0 0
    %115 = vmatpush.bf16.msra.mxu0 0
    %116 = vmatpush.bf16.msra.mxu0 0
    %117 = vmatpush.bf16.msra.mxu0 0
    %118 = vmatpush.bf16.msra.mxu0 0
    %119 = vmatpush.bf16.msra.mxu0 %v106
    %120 = vmatpush.bf16.msra.mxu0 %v105
    %121 = vmatmul.bf16.gmra.mxu0 %v111
    %v122 = vpop.f32.mrf.mxu0
    %v123 = vadd.f32 0.0, %v122
    %v124 = vpop.f32.mrf.mxu0
    %v125 = vadd.f32 0.0, %v124
    %126 = vdwg.mxu0
    %v127 = vmax.f32 %v123, 0.0
    %v128 = vmax.f32 %v125, 0.0
    %v129 = vld [vmem:[#allocation5] sm:$0xf]
    %v130 = vld [vmem:[#allocation5 + $0x4] sm:$0xf]
    %v133 = vunpack.c.l.b16 %v129
    %v134 = vunpack.c.l.b16 %v130
    %v135 = vpack.c.b16 %v134, %v133
    %v137 = vsel %vm109, %v135, 0
    %139 = vmatpush.bf16.msra.mxu0 0
    %140 = vmatpush.bf16.msra.mxu0 0
    %141 = vmatpush.bf16.msra.mxu0 0
    %142 = vmatpush.bf16.msra.mxu0 0
    %143 = vmatpush.bf16.msra.mxu0 0
    %144 = vmatpush.bf16.msra.mxu0 0
    %145 = vmatpush.bf16.msra.mxu0 %v106
    %146 = vmatpush.bf16.msra.mxu0 %v105
    %147 = vmatmul.bf16.gmra.mxu0 %v137
    %v148 = vpop.f32.mrf.mxu0
    %v149 = vadd.f32 0.0, %v148
    %v150 = vpop.f32.mrf.mxu0
    %v151 = vadd.f32 0.0, %v150
    %152 = vdwg.mxu0
    %v153 = vmax.f32 %v149, 0.0
    %v154 = vmax.f32 %v151, 0.0
    %v155 = vpack.c.bf16 %v127, %v127
    %v156 = vpack.c.bf16 %v128, %v128
    %v157 = vpack.c.bf16 %v153, %v153
    %v158 = vpack.c.bf16 %v154, %v154
    %159 = vst [vmem:[#allocation10] sm:$0xf] %v155
    %160 = vst [vmem:[#allocation10 + $0x4] sm:$0xf] %v156
    %161 = vst [vmem:[#allocation11] sm:$0xf] %v157
    %162 = vst [vmem:[#allocation11 + $0x4] sm:$0xf] %v158
    %v163 = vld [vmem:[#allocation8] sm:$0xf]
    %v164 = vld [vmem:[#allocation8 + $0x4] sm:$0xf]
    %v165 = vld [vmem:[#allocation8 + $0x8] sm:$0xf]
    %v166 = vld [vmem:[#allocation8 + $0xc] sm:$0xf]
    %v167 = vld [vmem:[#allocation8 + $0x10] sm:$0xf]
    %v168 = vld [vmem:[#allocation8 + $0x14] sm:$0xf]
    %v169 = vld [vmem:[#allocation8 + $0x18] sm:$0xf]
    %v170 = vld [vmem:[#allocation8 + $0x1c] sm:$0xf]
    %v171 = vld [vmem:[#allocation8 + $0x20] sm:$0xf]
    %v172 = vld [vmem:[#allocation8 + $0x24] sm:$0xf]
    %v173 = vld [vmem:[#allocation8 + $0x28] sm:$0xf]
    %v174 = vld [vmem:[#allocation8 + $0x2c] sm:$0xf]
    %v175 = vld [vmem:[#allocation8 + $0x30] sm:$0xf]
    %v176 = vld [vmem:[#allocation8 + $0x34] sm:$0xf]
    %v177 = vld [vmem:[#allocation8 + $0x38] sm:$0xf]
    %v178 = vld [vmem:[#allocation8 + $0x3c] sm:$0xf]
    %s179 = scalar_lea.vmem [#allocation8], 64
    %v180 = vld [vmem:[%s179] sm:$0xf]
    %v181 = vld [vmem:[%s179 + $0x4] sm:$0xf]
    %v182 = vld [vmem:[%s179 + $0x8] sm:$0xf]
    %v183 = vld [vmem:[%s179 + $0xc] sm:$0xf]
    %v184 = vld [vmem:[%s179 + $0x10] sm:$0xf]
    %v185 = vld [vmem:[%s179 + $0x14] sm:$0xf]
    %v186 = vld [vmem:[%s179 + $0x18] sm:$0xf]
    %v187 = vld [vmem:[%s179 + $0x1c] sm:$0xf]
    %v188 = vld [vmem:[%s179 + $0x20] sm:$0xf]
    %v189 = vld [vmem:[%s179 + $0x24] sm:$0xf]
    %v190 = vld [vmem:[%s179 + $0x28] sm:$0xf]
    %v191 = vld [vmem:[%s179 + $0x2c] sm:$0xf]
    %v192 = vld [vmem:[%s179 + $0x30] sm:$0xf]
    %v193 = vld [vmem:[%s179 + $0x34] sm:$0xf]
    %v194 = vld [vmem:[%s179 + $0x38] sm:$0xf]
    %v195 = vld [vmem:[%s179 + $0x3c] sm:$0xf]
    %v198 = vunpack.c.l.b16 %v157
    %v199 = vunpack.c.l.b16 %v158
    %v200 = vpack.c.b16 %v199, %v198
    %v218 = vunpack.c.l.b16 %v180
    %v219 = vunpack.c.l.b16 %v181
    %v220 = vunpack.c.l.b16 %v182
    %v221 = vunpack.c.l.b16 %v183
    %v222 = vunpack.c.l.b16 %v184
    %v223 = vunpack.c.l.b16 %v185
    %v224 = vunpack.c.l.b16 %v186
    %v225 = vunpack.c.l.b16 %v187
    %v226 = vunpack.c.l.b16 %v188
    %v227 = vunpack.c.l.b16 %v189
    %v228 = vunpack.c.l.b16 %v190
    %v229 = vunpack.c.l.b16 %v191
    %v230 = vunpack.c.l.b16 %v192
    %v231 = vunpack.c.l.b16 %v193
    %v232 = vunpack.c.l.b16 %v194
    %v233 = vunpack.c.l.b16 %v195
    %v234 = vpack.c.b16 %v219, %v218
    %v235 = vpack.c.b16 %v221, %v220
    %v236 = vpack.c.b16 %v223, %v222
    %v237 = vpack.c.b16 %v225, %v224
    %v238 = vpack.c.b16 %v227, %v226
    %v239 = vpack.c.b16 %v229, %v228
    %v240 = vpack.c.b16 %v231, %v230
    %v241 = vpack.c.b16 %v233, %v232
    %250 = vmatpush.bf16.msra.mxu0 %v241
    %251 = vmatpush.bf16.msra.mxu0 %v240
    %252 = vmatpush.bf16.msra.mxu0 %v239
    %253 = vmatpush.bf16.msra.mxu0 %v238
    %254 = vmatpush.bf16.msra.mxu0 %v237
    %255 = vmatpush.bf16.msra.mxu0 %v236
    %256 = vmatpush.bf16.msra.mxu0 %v235
    %257 = vmatpush.bf16.msra.mxu0 %v234
    %258 = vmatmul.bf16.gmra.mxu0 %v200
    %v259 = vpop.f32.mrf.mxu0
    %v260 = vadd.f32 0.0, %v259
    %v261 = vpop.f32.mrf.mxu0
    %v262 = vadd.f32 0.0, %v261
    %263 = vdwg.mxu0
    %v266 = vunpack.c.l.b16 %v155
    %v267 = vunpack.c.l.b16 %v156
    %v268 = vpack.c.b16 %v267, %v266
    %v286 = vunpack.c.l.b16 %v163
    %v287 = vunpack.c.l.b16 %v164
    %v288 = vunpack.c.l.b16 %v165
    %v289 = vunpack.c.l.b16 %v166
    %v290 = vunpack.c.l.b16 %v167
    %v291 = vunpack.c.l.b16 %v168
    %v292 = vunpack.c.l.b16 %v169
    %v293 = vunpack.c.l.b16 %v170
    %v294 = vunpack.c.l.b16 %v171
    %v295 = vunpack.c.l.b16 %v172
    %v296 = vunpack.c.l.b16 %v173
    %v297 = vunpack.c.l.b16 %v174
    %v298 = vunpack.c.l.b16 %v175
    %v299 = vunpack.c.l.b16 %v176
    %v300 = vunpack.c.l.b16 %v177
    %v301 = vunpack.c.l.b16 %v178
    %v302 = vpack.c.b16 %v287, %v286
    %v303 = vpack.c.b16 %v289, %v288
    %v304 = vpack.c.b16 %v291, %v290
    %v305 = vpack.c.b16 %v293, %v292
    %v306 = vpack.c.b16 %v295, %v294
    %v307 = vpack.c.b16 %v297, %v296
    %v308 = vpack.c.b16 %v299, %v298
    %v309 = vpack.c.b16 %v301, %v300
    %318 = vmatpush.bf16.msra.mxu0 %v309
    %319 = vmatpush.bf16.msra.mxu0 %v308
    %320 = vmatpush.bf16.msra.mxu0 %v307
    %321 = vmatpush.bf16.msra.mxu0 %v306
    %322 = vmatpush.bf16.msra.mxu0 %v305
    %323 = vmatpush.bf16.msra.mxu0 %v304
    %324 = vmatpush.bf16.msra.mxu0 %v303
    %325 = vmatpush.bf16.msra.mxu0 %v302
    %326 = vmatmul.bf16.gmra.mxu0 %v268
    %v327 = vpop.f32.mrf.mxu0
    %v328 = vadd.f32 %v260, %v327
    %v329 = vpop.f32.mrf.mxu0
    %v330 = vadd.f32 %v262, %v329
    %331 = vdwg.mxu0
    %332 = vst [vmem:[#allocation13] sm:$0xff] %v328
    %333 = vst [vmem:[#allocation13 + $0x8] sm:$0xff] %v330
    // Predicated region
    $region34: #{tpu_custom_call.1} parent=1 // pred_check
      _
    $region35: #{tpu_custom_call.1} parent=1 // pred_check_branch
      %335 = sbr.rel (0) target = $region37
    $region36: #{tpu_custom_call.1} parent=1 // pred_region
      %337 = vsyncadd [#allocation4], 0
      %s338 = sshll.u32 [#allocation10], 4
      %s339 = int_to_ptr.vmem [resolvable:$true] %s338
      %s340 = sshll.u32 %s4, 4
      %s341 = int_to_ptr.hbm [resolvable:$true] %s340
      %346 = dma.vmem_to_hbm [thread:$0]  %s339, 128, %s341, [#allocation4], 64, 64, 4
    $region37: #{tpu_custom_call.1} parent=1 // pred_fallthru
      _
    // Predicated region
    $region38: #{tpu_custom_call.1} parent=1 // pred_check
      _
    $region39: #{tpu_custom_call.1} parent=1 // pred_check_branch
      %348 = sbr.rel (0) target = $region41
    $region40: #{tpu_custom_call.1} parent=1 // pred_region
      %350 = vsyncadd [#allocation12], 0
      %s351 = sshll.u32 [#allocation11], 4
      %s352 = int_to_ptr.vmem [resolvable:$true] %s351
      %s353 = sshll.u32 %s5, 4
      %s354 = int_to_ptr.hbm [resolvable:$true] %s353
      %359 = dma.vmem_to_hbm [thread:$0]  %s352, 128, %s354, [#allocation12], 64, 64, 4
    $region41: #{tpu_custom_call.1} parent=1 // pred_fallthru
      _
    // Predicated region
    $region42: #{tpu_custom_call.1} parent=1 // pred_check
      _
    $region43: #{tpu_custom_call.1} parent=1 // pred_check_branch
      %361 = sbr.rel (0) target = $region45
    $region44: #{tpu_custom_call.1} parent=1 // pred_region
      %363 = vsyncadd [#allocation12], 0
      %s364 = sshll.u32 [#allocation13], 4
      %s365 = int_to_ptr.vmem [resolvable:$true] %s364
      %s366 = sshll.u32 %s6, 4
      %s367 = int_to_ptr.hbm [resolvable:$true] %s366
      %372 = dma.vmem_to_hbm [thread:$0]  %s365, 256, %s367, [#allocation12], 128, 128, 8
    $region45: #{tpu_custom_call.1} parent=1 // pred_fallthru
      _
    // Predicated region
    $region46: #{tpu_custom_call.1} parent=1 // pred_check
      _
    $region47: #{tpu_custom_call.1} parent=1 // pred_check_branch
      %374 = sbr.rel (0) target = $region49
    $region48: #{tpu_custom_call.1} parent=1 // pred_region
      %376 = dma.done [#allocation4], 128
    $region49: #{tpu_custom_call.1} parent=1 // pred_fallthru
      _
    // Predicated region
    $region50: #{tpu_custom_call.1} parent=1 // pred_check
      _
    $region51: #{tpu_custom_call.1} parent=1 // pred_check_branch
      %378 = sbr.rel (0) target = $region53
    $region52: #{tpu_custom_call.1} parent=1 // pred_region
      %380 = dma.done [#allocation12], 128
    $region53: #{tpu_custom_call.1} parent=1 // pred_fallthru
      _
    // Predicated region
    $region54: #{tpu_custom_call.1} parent=1 // pred_check
      _
    $region55: #{tpu_custom_call.1} parent=1 // pred_check_branch
      %382 = sbr.rel (0) target = $region57
    $region56: #{tpu_custom_call.1} parent=1 // pred_region
      %384 = dma.done [#allocation12], 256
    $region57: #{tpu_custom_call.1} parent=1 // pred_fallthru
      _
    %385 = vsyncpa [#allocation3], 1
    %386 = vsyncpa [#allocation6], 1
    %387 = vsyncpa [#allocation9], 1
    %388 = vsyncpa [#allocation4], 1
    %389 = vsyncpa [#allocation12], 1

</llo_original>
